<compile_context>
chip_gen: v7x
topology: tpu7x:2x2x1
jax: 0.10.0
libtpu: 0.0.40
codegen_flags: <defaults>
</compile_context>

<pallas_src>
import jax
import jax.numpy as jnp
from jax.experimental import pallas as pl
from jax.experimental.pallas import tpu as pltpu


# ---------------------------------------------------------------------------
# Small helpers
# ---------------------------------------------------------------------------
def _ceil_to(x, m):
    return -(-x // m) * m


def _lane_pad(c, lane=128):
    """Round a channel (lane) dim up to a multiple of 128 when the zero-padding
    overhead is <= 2x (lane-dense stores, full MXU N). Tiny channel counts keep
    their size so the memory-bound kernel doesn't pay extra HBM bytes."""
    target = _ceil_to(c, lane)
    return target if target <= 2 * c else c


def _vmem_capacity_bytes():
    try:
        return int(pltpu.get_tpu_info().vmem_capacity_bytes)
    except Exception:
        return 64 * 1024 * 1024  # conservative default: v7x per-TensorCore VMEM


def _max_tile_rows(budget, *, sw_p, wo_p, c4p, co4p, in_item, out_item):
    """Max output super-rows per grid step such that the TRUE per-step VMEM
    footprint (double-buffered blocks + in-kernel intermediates) fits budget."""
    per_row = (2 * sw_p * c4p * in_item        # main input block, double-buffered
               + 2 * wo_p * co4p * out_item    # output block, double-buffered
               + 2 * wo_p * co4p * 4           # acc + hi f32 accumulators
               + 2 * wo_p * c4p * in_item)     # shifted lhs operands (pessimistic)
    fixed = (2 * 2 * sw_p * c4p * in_item      # halo block, double-buffered (+margin)
             + 2 * 4 * c4p * co4p * in_item    # weight block (assume 2 buffers)
             + 2 * wo_p * co4p * (4 + out_item))  # last-row accum + store staging
    return max(int((budget - fixed) // per_row), 1)


def _choose_tile_rows(sh_out, max_rows):
    """Return (tile_rows, padded_sh_out)."""
    max_rows = max(1, int(max_rows))
    if sh_out <= max_rows:
        return sh_out, sh_out
    # Prefer a divisor of sh_out (no row padding) if it uses the budget well.
    best_div = 1
    for t in range(1, max_rows + 1):
        if sh_out % t == 0:
            best_div = t
    if 2 * best_div >= max_rows:
        return best_div, sh_out
    # Otherwise pad the row dim (zero rows, sliced off later) so a full-sized
    # tile divides it — avoids degrading to tiny tiles for awkward H.
    return max_rows, _ceil_to(sh_out, max_rows)


# ---------------------------------------------------------------------------
# Kernel: one output tile of the fused (conv3x3 + pixel-unshuffle) op.
# No im2col, no halo concat: 4 (+2 small) accumulating dots, f32 accumulation.
# ---------------------------------------------------------------------------
def _fused_conv2x2_kernel(xm_ref, xh_ref, w_ref, o_ref):
    # xm_ref : (1, T,  SW_p, C4p)  main super-rows of the s2d input tile
    # xh_ref : (1, 1,  SW_p, C4p)  one halo super-row (row (t+1)*T of the input)
    # w_ref  : (4, C4p, CO4p)      per-tap fused weight, tap = sy*2 + sx
    # o_ref  : (1, T, WO_p, CO4p)  output tile (already pixel-unshuffled, NHWC)
    _, T, _, C4 = xm_ref.shape
    WO = o_ref.shape[2]
    CO4 = o_ref.shape[3]

    # sy = 0 taps: every output row uses only main-tile rows 0..T-1.
    acc = jnp.dot(xm_ref[0, :, 0:WO, :].reshape(T * WO, C4), w_ref[0],
                  preferred_element_type=jnp.float32)
    acc = acc + jnp.dot(xm_ref[0, :, 1:WO + 1, :].reshape(T * WO, C4), w_ref[1],
                        preferred_element_type=jnp.float32)

    # sy = 1 taps for the LAST output row of the tile: only the halo row.
    last = jnp.dot(xh_ref[0, 0, 0:WO, :], w_ref[2],
                   preferred_element_type=jnp.float32)
    last = last + jnp.dot(xh_ref[0, 0, 1:WO + 1, :], w_ref[3],
                          preferred_element_type=jnp.float32)

    if T > 1:
        # sy = 1 taps for output rows 0..T-2: main-tile rows 1..T-1 (already
        # resident — no concat, no copy).
        hi = jnp.dot(xm_ref[0, 1:T, 0:WO, :].reshape((T - 1) * WO, C4), w_ref[2],
                     preferred_element_type=jnp.float32)
        hi = hi + jnp.dot(xm_ref[0, 1:T, 1:WO + 1, :].reshape((T - 1) * WO, C4),
                          w_ref[3], preferred_element_type=jnp.float32)
        low = (acc[:(T - 1) * WO] + hi).reshape(T - 1, WO, CO4)
        o_ref[0, 0:T - 1, :, :] = low.astype(o_ref.dtype)
        o_ref[0, T - 1, :, :] = (acc[(T - 1) * WO:] + last).astype(o_ref.dtype)
    else:
        o_ref[0, 0, :, :] = (acc.reshape(WO, CO4) + last).astype(o_ref.dtype)


# ---------------------------------------------------------------------------
# One-time data / weight transforms (plain JAX, outside the kernel; the pad +
# reshape + transpose + dtype cast fuse into a single XLA layout pass).
# ---------------------------------------------------------------------------
def _space_to_depth_pad(x_nchw, sh_pad, wo_pad, c4p, dtype):
    """NCHW -> zero-pad(1), space-to-depth(2), channels-last, aligned & cast.

    Output: (B, sh_pad + 1, wo_pad + 1, c4p); channel index uy*2*Cin + ux*Cin + ci
    corresponds to x_pad[b, ci, 2*s + uy, 2*t + ux]. Extra rows/cols/channels
    are zeros (they either feed zero taps or are sliced off after the kernel).
    """
    B, Cin, H, W = x_nchw.shape
    x_pad = jnp.pad(x_nchw, ((0, 0), (0, 0), (1, 1), (1, 1)))
    SH, SW = (H + 2) // 2, (W + 2) // 2
    x2 = x_pad.reshape(B, Cin, SH, 2, SW, 2)
    x2 = jnp.transpose(x2, (0, 2, 4, 3, 5, 1))            # (B, SH, SW, uy, ux, Cin)
    x2 = x2.reshape(B, SH, SW, 4 * Cin)
    x2 = jnp.pad(x2, ((0, 0),
                      (0, (sh_pad + 1) - SH),
                      (0, (wo_pad + 1) - SW),
                      (0, c4p - 4 * Cin)))
    return x2.astype(dtype)                               # bf16 cast folded in here


def _fuse_weight(w_oihw, c4p, co4p, dtype):
    """Fold PixelUnshuffle(2) into the conv weight.

    (Cout, Cin, 3, 3) -> (4, c4p, co4p): tap index = sy*2 + sx (2x2 valid conv
    over the space-to-depth input), K index = uy*2*Cin + ux*Cin + ci (matches the
    s2d channel ordering), output channel = co*4 + ry*2 + rx (PyTorch
    PixelUnshuffle order). Zero-padded to the lane-aligned sizes and pre-cast.
    """
    Cout, Cin = w_oihw.shape[0], w_oihw.shape[1]
    w_hwio = jnp.transpose(w_oihw, (2, 3, 1, 0)).astype(jnp.float32)  # (3,3,Cin,Cout)
    # 4x4 stride-2 equivalent: W4[py,px,ci, co*4+ry*2+rx] = w[py-ry, px-rx, ci, co]
    w4 = jnp.zeros((4, 4, Cin, Cout, 2, 2), dtype=jnp.float32)
    for ry in range(2):
        for rx in range(2):
            w4 = w4.at[ry:ry + 3, rx:rx + 3, :, :, ry, rx].set(w_hwio)
    w4 = w4.reshape(4, 4, Cin, 4 * Cout)                  # co4 = co*4 + ry*2 + rx
    w2 = w4.reshape(2, 2, 2, 2, Cin, 4 * Cout)            # (sy, uy, sx, ux, ci, co4)
    w2 = jnp.transpose(w2, (0, 2, 1, 3, 4, 5))            # (sy, sx, uy, ux, ci, co4)
    w_taps = w2.reshape(4, 4 * Cin, 4 * Cout)             # (tap, K, co4)
    w_taps = jnp.pad(w_taps, ((0, 0), (0, c4p - 4 * Cin), (0, co4p - 4 * Cout)))
    return w_taps.astype(dtype)                           # one-time cast (not per step)


# ---------------------------------------------------------------------------
# Public wrapper
# ---------------------------------------------------------------------------
def downsample_pallas(x_nchw, w_oihw, *, matmul_dtype=None, out_dtype=None,
                      output_layout="NCHW", vmem_limit_bytes=None,
                      max_tile_rows=None):
    """Downsample forward: Conv2d(n_feat, n_feat//2, 3, 1, 1, bias=False)
    followed by PixelUnshuffle(2).

    x_nchw : (B, n_feat, H, W)           H, W must be even
    w_oihw : (n_feat//2, n_feat, 3, 3)   PyTorch conv weight layout
    returns: (B, 2*n_feat, H//2, W//2)   NCHW (or NHWC if output_layout="NHWC")

    matmul_dtype: MXU operand dtype (accumulation stays f32). Pass jnp.bfloat16
    on v6e/v7x (bf16-native MXU + halved HBM traffic) when the accuracy budget
    allows; the cast happens in the prep pass, never inside the kernel.
    """
    B, Cin, H, W = x_nchw.shape
    Cout = w_oihw.shape[0]
    assert H % 2 == 0 and W % 2 == 0, "PixelUnshuffle(2) requires even H and W"
    assert w_oihw.shape == (Cout, Cin, 3, 3)
    if matmul_dtype is None:
        matmul_dtype = x_nchw.dtype
    if out_dtype is None:
        out_dtype = x_nchw.dtype

    C4, CO4 = 4 * Cin, 4 * Cout
    C4p, CO4p = _lane_pad(C4), _lane_pad(CO4)
    SH_OUT, WO = H // 2, W // 2
    WO_pad = _ceil_to(WO, 8)                 # copy-free reshapes / sublane layout
    SW_p = WO_pad + 1                        # s2d input super-cols incl. right pad

    in_item = jnp.dtype(matmul_dtype).itemsize
    out_item = jnp.dtype(out_dtype).itemsize

    if vmem_limit_bytes is None:
        cap = _vmem_capacity_bytes()         # 64 MiB on v7x, 128 MiB on v5e/v6e
        vmem_limit_bytes = max(min(int(cap * 3 // 4), cap - (8 << 20)), 16 << 20)

    max_rows = _max_tile_rows(int(vmem_limit_bytes * 0.85),
                              sw_p=SW_p, wo_p=WO_pad, c4p=C4p, co4p=CO4p,
                              in_item=in_item, out_item=out_item)
    if max_tile_rows is not None:
        max_rows = min(max_rows, max_tile_rows)
    tile_sh, SH_pad = _choose_tile_rows(SH_OUT, max_rows)
    n_tiles = SH_pad // tile_sh

    x2 = _space_to_depth_pad(x_nchw, SH_pad, WO_pad, C4p, matmul_dtype)
    w_taps = _fuse_weight(w_oihw, C4p, CO4p, matmul_dtype)

    z = pl.pallas_call(
        _fused_conv2x2_kernel,
        out_shape=jax.ShapeDtypeStruct((B, SH_pad, WO_pad, CO4p), out_dtype),
        grid_spec=pltpu.PrefetchScalarGridSpec(
            num_scalar_prefetch=0,
            grid=(B, n_tiles),
            in_specs=[
                # main super-rows of the tile: rows [t*tile_sh, (t+1)*tile_sh)
                pl.BlockSpec((1, tile_sh, SW_p, C4p), lambda b, t: (b, t, 0, 0)),
                # 1-row halo: row (t+1)*tile_sh (block height 1 => element index)
                pl.BlockSpec((1, 1, SW_p, C4p),
                             lambda b, t: (b, (t + 1) * tile_sh, 0, 0)),
                # fused per-tap weight, same block every step (stays resident)
                pl.BlockSpec((4, C4p, CO4p), lambda b, t: (0, 0, 0)),
            ],
            out_specs=pl.BlockSpec((1, tile_sh, WO_pad, CO4p),
                                   lambda b, t: (b, t, 0, 0)),
        ),
        compiler_params=pltpu.CompilerParams(
            # both axes independent => both TensorCores busy on v7x even at B=1
            dimension_semantics=("parallel", "parallel"),
            vmem_limit_bytes=int(vmem_limit_bytes),
        ),
    )(x2, x2, w_taps)

    # Strip alignment padding; for NCHW the slice fuses with the transpose into
    # one layout pass (the PixelUnshuffle itself was folded into the weight).
    z = z[:, :SH_OUT, :WO, :CO4]
    if output_layout == "NHWC":
        return z
    return jnp.transpose(z, (0, 3, 1, 2))


# ---------------------------------------------------------------------------
# Reference (for the self-test)
# ---------------------------------------------------------------------------
def pixel_unshuffle_nchw(x, r=2):
    """PyTorch nn.PixelUnshuffle(r) semantics on NCHW input."""
    B, C, H, W = x.shape
    x = x.reshape(B, C, H // r, r, W // r, r)
    x = x.transpose(0, 1, 3, 5, 2, 4)
    return x.reshape(B, C * r * r, H // r, W // r)


def _ref_downsample(x, w):
    y = jax.lax.conv_general_dilated(
        x, w, window_strides=(1, 1), padding=((1, 1), (1, 1)),
        dimension_numbers=("NCHW", "OIHW", "NCHW"))
    return pixel_unshuffle_nchw(y, r=2)


if __name__ == "__main__":
    key = jax.random.PRNGKey(0)
    kx, kw = jax.random.split(key)

    # Module-consistent small shapes: n_feat=4 -> Conv2d(4, 2, 3, 1, 1), PU(2).
    B, n_feat, H, W = 2, 4, 16, 16
    x = jax.random.normal(kx, (B, n_feat, H, W), dtype=jnp.float32)
    w = jax.random.normal(kw, (n_feat // 2, n_feat, 3, 3), dtype=jnp.float32) * 0.1
    ref = _ref_downsample(x, w)

    # 1) Single-tile path.
    out = jax.block_until_ready(downsample_pallas(x, w))
    assert out.shape == (B, 2 * n_feat, H // 2, W // 2), out.shape
    err = float(jnp.max(jnp.abs(out - ref)))
    assert jnp.allclose(out, ref, atol=1e-4, rtol=1e-4), err

    # 2) Multi-tile rows: exercises the halo-row handling across tile boundaries.
    out_t = jax.block_until_ready(downsample_pallas(x, w, max_tile_rows=2))
    err_t = float(jnp.max(jnp.abs(out_t - ref)))
    assert jnp.allclose(out_t, ref, atol=1e-4, rtol=1e-4), err_t

    # 3) Width whose half is not a multiple of 8: exercises the alignment padding.
    x3 = jax.random.normal(jax.random.PRNGKey(1), (1, n_feat, 12, 12),
                           dtype=jnp.float32)
    ref3 = _ref_downsample(x3, w)
    out3 = jax.block_until_ready(downsample_pallas(x3, w))
    err3 = float(jnp.max(jnp.abs(out3 - ref3)))
    assert jnp.allclose(out3, ref3, atol=1e-4, rtol=1e-4), err3

    # 4) bf16 MXU-operand path (cast done in the prep pass, f32 accumulation).
    out_bf = jax.block_until_ready(
        downsample_pallas(x, w, matmul_dtype=jnp.bfloat16))
    err_bf = float(jnp.max(jnp.abs(out_bf - ref)))
    assert jnp.allclose(out_bf, ref, atol=5e-2, rtol=5e-2), err_bf

    print("KERNEL_OK")
</pallas_src>

<mosaic_0001>
module attributes {stable_mosaic.version = 11 : i64} {
  func.func @_fused_conv2x2_kernel(%arg0: i32, %arg1: i32, %arg2: memref<1x8x9x16xf32, #tpu.memory_space<vmem>>, %arg3: memref<1x1x9x16xf32, #tpu.memory_space<vmem>>, %arg4: memref<4x16x8xf32, #tpu.memory_space<vmem>>, %arg5: memref<1x8x8x8xf32, #tpu.memory_space<vmem>>) attributes {dimension_semantics = [#tpu.dimension_semantics<parallel>, #tpu.dimension_semantics<parallel>], iteration_bounds = array<i64: 2, 1>, scalar_prefetch = 0 : i64, scratch_operands = 0 : i64, tpu.core_type = #tpu.core_type<tc>, window_params = [{transform_indices = @transform_0, window_bounds = array<i64: 1, 8, 9, 16>}, {transform_indices = @transform_1, window_bounds = array<i64: 1, 1, 9, 16>}, {pipeline_mode = #tpu.pipeline_mode<synchronous>, transform_indices = @transform_2, window_bounds = array<i64: 4, 16, 8>}, {transform_indices = @transform_3, window_bounds = array<i64: 1, 8, 8, 8>}]} {
    %c0 = arith.constant 0 : index
    %c0_0 = arith.constant 0 : index
    %c0_1 = arith.constant 0 : index
    %c0_2 = arith.constant 0 : index
    %0 = vector.load %arg2[%c0, %c0_0, %c0_1, %c0_2] : memref<1x8x9x16xf32, #tpu.memory_space<vmem>>, vector<1x8x8x16xf32>
    %1 = vector.shape_cast %0 : vector<1x8x8x16xf32> to vector<8x8x16xf32>
    %2 = vector.shape_cast %1 : vector<8x8x16xf32> to vector<64x16xf32>
    %c0_3 = arith.constant 0 : index
    %c0_4 = arith.constant 0 : index
    %c0_5 = arith.constant 0 : index
    %3 = vector.load %arg4[%c0_3, %c0_4, %c0_5] : memref<4x16x8xf32, #tpu.memory_space<vmem>>, vector<1x16x8xf32>
    %4 = vector.shape_cast %3 : vector<1x16x8xf32> to vector<16x8xf32>
    %cst = arith.constant dense<0.000000e+00> : vector<64x8xf32>
    %5 = tpu.matmul %2, %4, %cst {dimension_numbers = #tpu.dot_dimension_numbers<[1], [0], [0], [1], [0, 0, 1, 1], [], []>} : vector<64x16xf32>, vector<16x8xf32>, vector<64x8xf32> -> vector<64x8xf32>
    %c0_6 = arith.constant 0 : index
    %c0_7 = arith.constant 0 : index
    %c1 = arith.constant 1 : index
    %c0_8 = arith.constant 0 : index
    %6 = vector.load %arg2[%c0_6, %c0_7, %c1, %c0_8] : memref<1x8x9x16xf32, #tpu.memory_space<vmem>>, vector<1x8x8x16xf32>
    %7 = vector.shape_cast %6 : vector<1x8x8x16xf32> to vector<8x8x16xf32>
    %8 = vector.shape_cast %7 : vector<8x8x16xf32> to vector<64x16xf32>
    %c1_9 = arith.constant 1 : index
    %c0_10 = arith.constant 0 : index
    %c0_11 = arith.constant 0 : index
    %9 = vector.load %arg4[%c1_9, %c0_10, %c0_11] : memref<4x16x8xf32, #tpu.memory_space<vmem>>, vector<1x16x8xf32>
    %10 = vector.shape_cast %9 : vector<1x16x8xf32> to vector<16x8xf32>
    %cst_12 = arith.constant dense<0.000000e+00> : vector<64x8xf32>
    %11 = tpu.matmul %8, %10, %cst_12 {dimension_numbers = #tpu.dot_dimension_numbers<[1], [0], [0], [1], [0, 0, 1, 1], [], []>} : vector<64x16xf32>, vector<16x8xf32>, vector<64x8xf32> -> vector<64x8xf32>
    %12 = arith.addf %5, %11 : vector<64x8xf32>
    %c0_13 = arith.constant 0 : index
    %c0_14 = arith.constant 0 : index
    %c0_15 = arith.constant 0 : index
    %c0_16 = arith.constant 0 : index
    %13 = vector.load %arg3[%c0_13, %c0_14, %c0_15, %c0_16] : memref<1x1x9x16xf32, #tpu.memory_space<vmem>>, vector<1x1x8x16xf32>
    %14 = vector.shape_cast %13 : vector<1x1x8x16xf32> to vector<8x16xf32>
    %c2 = arith.constant 2 : index
    %c0_17 = arith.constant 0 : index
    %c0_18 = arith.constant 0 : index
    %15 = vector.load %arg4[%c2, %c0_17, %c0_18] : memref<4x16x8xf32, #tpu.memory_space<vmem>>, vector<1x16x8xf32>
    %16 = vector.shape_cast %15 : vector<1x16x8xf32> to vector<16x8xf32>
    %cst_19 = arith.constant dense<0.000000e+00> : vector<8x8xf32>
    %17 = tpu.matmul %14, %16, %cst_19 {dimension_numbers = #tpu.dot_dimension_numbers<[1], [0], [0], [1], [0, 0, 1, 1], [], []>} : vector<8x16xf32>, vector<16x8xf32>, vector<8x8xf32> -> vector<8x8xf32>
    %c0_20 = arith.constant 0 : index
    %c0_21 = arith.constant 0 : index
    %c1_22 = arith.constant 1 : index
    %c0_23 = arith.constant 0 : index
    %18 = vector.load %arg3[%c0_20, %c0_21, %c1_22, %c0_23] : memref<1x1x9x16xf32, #tpu.memory_space<vmem>>, vector<1x1x8x16xf32>
    %19 = vector.shape_cast %18 : vector<1x1x8x16xf32> to vector<8x16xf32>
    %c3 = arith.constant 3 : index
    %c0_24 = arith.constant 0 : index
    %c0_25 = arith.constant 0 : index
    %20 = vector.load %arg4[%c3, %c0_24, %c0_25] : memref<4x16x8xf32, #tpu.memory_space<vmem>>, vector<1x16x8xf32>
    %21 = vector.shape_cast %20 : vector<1x16x8xf32> to vector<16x8xf32>
    %cst_26 = arith.constant dense<0.000000e+00> : vector<8x8xf32>
    %22 = tpu.matmul %19, %21, %cst_26 {dimension_numbers = #tpu.dot_dimension_numbers<[1], [0], [0], [1], [0, 0, 1, 1], [], []>} : vector<8x16xf32>, vector<16x8xf32>, vector<8x8xf32> -> vector<8x8xf32>
    %23 = arith.addf %17, %22 : vector<8x8xf32>
    %c0_27 = arith.constant 0 : index
    %c1_28 = arith.constant 1 : index
    %c0_29 = arith.constant 0 : index
    %c0_30 = arith.constant 0 : index
    %24 = vector.load %arg2[%c0_27, %c1_28, %c0_29, %c0_30] : memref<1x8x9x16xf32, #tpu.memory_space<vmem>>, vector<1x7x8x16xf32>
    %25 = vector.shape_cast %24 : vector<1x7x8x16xf32> to vector<7x8x16xf32>
    %26 = vector.shape_cast %25 : vector<7x8x16xf32> to vector<56x16xf32>
    %c2_31 = arith.constant 2 : index
    %c0_32 = arith.constant 0 : index
    %c0_33 = arith.constant 0 : index
    %27 = vector.load %arg4[%c2_31, %c0_32, %c0_33] : memref<4x16x8xf32, #tpu.memory_space<vmem>>, vector<1x16x8xf32>
    %28 = vector.shape_cast %27 : vector<1x16x8xf32> to vector<16x8xf32>
    %cst_34 = arith.constant dense<0.000000e+00> : vector<56x8xf32>
    %29 = tpu.matmul %26, %28, %cst_34 {dimension_numbers = #tpu.dot_dimension_numbers<[1], [0], [0], [1], [0, 0, 1, 1], [], []>} : vector<56x16xf32>, vector<16x8xf32>, vector<56x8xf32> -> vector<56x8xf32>
    %c0_35 = arith.constant 0 : index
    %c1_36 = arith.constant 1 : index
    %c1_37 = arith.constant 1 : index
    %c0_38 = arith.constant 0 : index
    %30 = vector.load %arg2[%c0_35, %c1_36, %c1_37, %c0_38] : memref<1x8x9x16xf32, #tpu.memory_space<vmem>>, vector<1x7x8x16xf32>
    %31 = vector.shape_cast %30 : vector<1x7x8x16xf32> to vector<7x8x16xf32>
    %32 = vector.shape_cast %31 : vector<7x8x16xf32> to vector<56x16xf32>
    %c3_39 = arith.constant 3 : index
    %c0_40 = arith.constant 0 : index
    %c0_41 = arith.constant 0 : index
    %33 = vector.load %arg4[%c3_39, %c0_40, %c0_41] : memref<4x16x8xf32, #tpu.memory_space<vmem>>, vector<1x16x8xf32>
    %34 = vector.shape_cast %33 : vector<1x16x8xf32> to vector<16x8xf32>
    %cst_42 = arith.constant dense<0.000000e+00> : vector<56x8xf32>
    %35 = tpu.matmul %32, %34, %cst_42 {dimension_numbers = #tpu.dot_dimension_numbers<[1], [0], [0], [1], [0, 0, 1, 1], [], []>} : vector<56x16xf32>, vector<16x8xf32>, vector<56x8xf32> -> vector<56x8xf32>
    %36 = arith.addf %29, %35 : vector<56x8xf32>
    %37 = vector.extract_strided_slice %12 {offsets = [0, 0], sizes = [56, 8], strides = [1, 1]} : vector<64x8xf32> to vector<56x8xf32>
    %38 = arith.addf %37, %36 : vector<56x8xf32>
    %39 = vector.shape_cast %38 : vector<56x8xf32> to vector<7x8x8xf32>
    %c0_43 = arith.constant 0 : index
    %c0_44 = arith.constant 0 : index
    %c0_45 = arith.constant 0 : index
    %c0_46 = arith.constant 0 : index
    %40 = vector.load %arg5[%c0_43, %c0_44, %c0_45, %c0_46] : memref<1x8x8x8xf32, #tpu.memory_space<vmem>>, vector<1x7x8x8xf32>
    %41 = vector.shape_cast %40 : vector<1x7x8x8xf32> to vector<7x8x8xf32>
    %42 = vector.shape_cast %39 : vector<7x8x8xf32> to vector<1x7x8x8xf32>
    tpu.vector_store %arg5[%c0_43, %c0_44, %c0_45, %c0_46], %42 {strides = array<i32>} : memref<1x8x8x8xf32, #tpu.memory_space<vmem>>, vector<1x7x8x8xf32>,
    %43 = vector.extract_strided_slice %12 {offsets = [56, 0], sizes = [8, 8], strides = [1, 1]} : vector<64x8xf32> to vector<8x8xf32>
    %44 = arith.addf %43, %23 : vector<8x8xf32>
    %c0_47 = arith.constant 0 : index
    %c7 = arith.constant 7 : index
    %c0_48 = arith.constant 0 : index
    %c0_49 = arith.constant 0 : index
    %45 = vector.load %arg5[%c0_47, %c7, %c0_48, %c0_49] : memref<1x8x8x8xf32, #tpu.memory_space<vmem>>, vector<1x1x8x8xf32>
    %46 = vector.shape_cast %45 : vector<1x1x8x8xf32> to vector<8x8xf32>
    %47 = vector.shape_cast %44 : vector<8x8xf32> to vector<1x1x8x8xf32>
    tpu.vector_store %arg5[%c0_47, %c7, %c0_48, %c0_49], %47 {strides = array<i32>} : memref<1x8x8x8xf32, #tpu.memory_space<vmem>>, vector<1x1x8x8xf32>,
    return
  }
  func.func @transform_0(%arg0: i32, %arg1: i32) -> (i32, i32, i32, i32) {
    %c0_i32 = arith.constant 0 : i32
    %c0_i32_0 = arith.constant 0 : i32
    %c0_i32_1 = arith.constant 0 : i32
    return %arg0, %arg1, %c0_i32, %c0_i32_0 : i32, i32, i32, i32
  }
  func.func @transform_1(%arg0: i32, %arg1: i32) -> (i32, i32, i32, i32) {
    %c1_i32 = arith.constant 1 : i32
    %0 = arith.addi %arg1, %c1_i32 : i32
    %c8_i32 = arith.constant 8 : i32
    %1 = arith.muli %0, %c8_i32 : i32
    %c0_i32 = arith.constant 0 : i32
    %c0_i32_0 = arith.constant 0 : i32
    %c0_i32_1 = arith.constant 0 : i32
    return %arg0, %1, %c0_i32, %c0_i32_0 : i32, i32, i32, i32
  }
  func.func @transform_2(%arg0: i32, %arg1: i32) -> (i32, i32, i32) {
    %c0_i32 = arith.constant 0 : i32
    %c0_i32_0 = arith.constant 0 : i32
    %c0_i32_1 = arith.constant 0 : i32
    %c0_i32_2 = arith.constant 0 : i32
    return %c0_i32, %c0_i32_0, %c0_i32_1 : i32, i32, i32
  }
  func.func @transform_3(%arg0: i32, %arg1: i32) -> (i32, i32, i32, i32) {
    %c0_i32 = arith.constant 0 : i32
    %c0_i32_0 = arith.constant 0 : i32
    %c0_i32_1 = arith.constant 0 : i32
    return %arg0, %arg1, %c0_i32, %c0_i32_0 : i32, i32, i32, i32
  }
}

</mosaic_0001>

<llo_original>
// kernel: tpu_custom_call.1
$region0: #{tpu_custom_call.1}
  #allocation0 [shape = 'u32[]', space=smem, size = 0x4, offset = 0x4, fixed_abs, tag = 'smem constant byte address 0x4 - core index']
  #allocation1 [shape = 'u32[144,128]{1,0:T(1,128)}', space=vmem, size = 0x12000, scoped, tag = 'internal scratch']
  %s0 = inlined_call_operand.vmem [shape: f32[2,9,9,16], index: 0, kind: input, shape index: {}]
  %s1 = inlined_call_operand.vmem [shape: f32[2,9,9,16], index: 1, kind: input, shape index: {}]
  %s2 = inlined_call_operand.vmem [shape: f32[4,16,8], index: 2, kind: input, shape index: {}]
  %s3 = inlined_call_operand.hbm [shape: f32[2,8,8,8], index: 3, kind: output, shape index: {}]
  %s4 = sld [smem:[#allocation0]]
  $region45: #{tpu_custom_call.1} parent=0
    _
  %s6 = ssub.s32 1, %s4
  %s7 = scalar_select 0, %s6, %s4
  $region1: #{tpu_custom_call.1} parent=0
    #allocation2 [shape = 'u8[65536]{0}', space=vmem, size = 0x10000, scoped, tag = 'output window, operand 0']
    #allocation3 [shape = 's32[2]{0}', space=sflag, size = 0x8, scoped, tag = 'scoped memory for tpu_custom_call.1']
    %8 = vsyncpa [#allocation3], 0
    %s9 = scalar_lea.sflag [#allocation3], 1
    %10 = vsyncpa %s9, 0
    loop: start=0, step=1, limit=4
    $region2: #{tpu_custom_call.1} parent=1 // loop_pre_header
      _
    $region3: #{tpu_custom_call.1} parent=1 // loop_header
      %s12 = sphi 0, %s16
      %p13 = scmp.ge.s32.totalorder %s12, 4
      %s19 = sphi 0, %s31
      %s20 = sphi 0, %s27
      %s21 = sphi 0, %s19
      %s22 = sphi 0, %s20
      %s23 = sphi 0, %s21
      %s24 = sphi 0, %s22
      %s36 = sphi 0, %s38
      %s39 = sphi 0, %s36
      %s40 = sphi 0, %s39
      %s56 = sphi 0, %s40
      %s68 = sphi 0, %s70
      %s71 = sphi 0, %s68
      %s72 = sphi 0, %s71
      %s88 = sphi 0, %s72
      %s92 = sphi 0, %s92
      %s94 = sphi 0, %s92
      %s95 = sphi 0, %s94
      %s109 = sphi 0, %s95
      %s117 = sphi 0, %s119
      %s120 = sphi 0, %s117
      %s121 = sphi 0, %s120
      %s137 = sphi 0, %s121
    $region4: #{tpu_custom_call.1} parent=1 // loop_header_branch
      %15 = sbr.rel (%p13) target = $region8
    $region5: #{tpu_custom_call.1} parent=1 // loop_body
      %s17 = ssub.s32 %s12, 1
      %s18 = ssub.s32 %s12, 2
      %s25 = sadd.s32 1, %s20
      %p26 = scmp.ge.s32.totalorder %s25, 1
      %s27 = scalar_select %p26, 0, %s25
      %s28 = sadd.s32 1, %s19
      %s29 = scalar_select %p26, %s28, %s19
      %p30 = scmp.ge.s32.totalorder %s29, 2
      %s31 = scalar_select %p30, 0, %s29
      %s32 = ssub.s32 %s19, %s31
      %s33 = ssub.s32 %s20, %s27
      %s34 = sor.u32 %s32, %s33
      %p35 = scmp.eq.s32.totalorder %s34, 0
      %s37 = sadd.s32 %s36, 1
      %s38 = scalar_select %p35, %s36, %s37
      %p41 = pneg %p35
      %p42 = scmp.eq.s32.totalorder %s12, 1
      %p43 = por %p41, %p42
      %p44 = scmp.ne.s32.totalorder %s36, %s39
      %p45 = scmp.eq.s32.totalorder %s12, 0
      %p46 = por %p44, %p45
      %p47 = scmp.ne.s32.totalorder %s36, %s39
      %p48 = scmp.eq.s32.totalorder %s17, 1
      %p49 = por %p47, %p48
      %p50 = scmp.ne.s32.totalorder %s39, %s40
      %p51 = scmp.eq.s32.totalorder %s17, 0
      %p52 = por %p50, %p51
      %p53 = scmp.ne.s32.totalorder %s39, %s40
      %p54 = scmp.eq.s32.totalorder %s18, 1
      %p55 = por %p53, %p54
      %p57 = scmp.ne.s32.totalorder %s40, %s56
      %p58 = scmp.eq.s32.totalorder %s18, 0
      %p59 = por %p57, %p58
      %s60 = sadd.s32 %s20, 1
      %s61 = smul.u32 %s60, 8
      %s62 = sadd.s32 %s27, 1
      %s63 = smul.u32 %s62, 8
      %s64 = ssub.s32 %s19, %s31
      %s65 = ssub.s32 %s61, %s63
      %s66 = sor.u32 %s64, %s65
      %p67 = scmp.eq.s32.totalorder %s66, 0
      %s69 = sadd.s32 %s68, 1
      %s70 = scalar_select %p67, %s68, %s69
      %p73 = pneg %p67
      %p74 = scmp.eq.s32.totalorder %s12, 1
      %p75 = por %p73, %p74
      %p76 = scmp.ne.s32.totalorder %s68, %s71
      %p77 = scmp.eq.s32.totalorder %s12, 0
      %p78 = por %p76, %p77
      %p79 = scmp.ne.s32.totalorder %s68, %s71
      %p80 = scmp.eq.s32.totalorder %s17, 1
      %p81 = por %p79, %p80
      %p82 = scmp.ne.s32.totalorder %s71, %s72
      %p83 = scmp.eq.s32.totalorder %s17, 0
      %p84 = por %p82, %p83
      %p85 = scmp.ne.s32.totalorder %s71, %s72
      %p86 = scmp.eq.s32.totalorder %s18, 1
      %p87 = por %p85, %p86
      %p89 = scmp.ne.s32.totalorder %s72, %s88
      %p90 = scmp.eq.s32.totalorder %s18, 0
      %p91 = por %p89, %p90
      %s93 = sadd.s32 %s92, 1
      %p96 = scmp.eq.s32.totalorder %s12, 1
      %p97 = scmp.ne.s32.totalorder %s92, %s94
      %p98 = scmp.eq.s32.totalorder %s12, 0
      %p99 = por %p97, %p98
      %p100 = scmp.ne.s32.totalorder %s92, %s94
      %p101 = scmp.eq.s32.totalorder %s17, 1
      %p102 = por %p100, %p101
      %p103 = scmp.ne.s32.totalorder %s94, %s95
      %p104 = scmp.eq.s32.totalorder %s17, 0
      %p105 = por %p103, %p104
      %p106 = scmp.ne.s32.totalorder %s94, %s95
      %p107 = scmp.eq.s32.totalorder %s18, 1
      %p108 = por %p106, %p107
      %p110 = scmp.ne.s32.totalorder %s95, %s109
      %p111 = scmp.eq.s32.totalorder %s18, 0
      %p112 = por %p110, %p111
      %s113 = ssub.s32 %s19, %s31
      %s114 = ssub.s32 %s20, %s27
      %s115 = sor.u32 %s113, %s114
      %p116 = scmp.eq.s32.totalorder %s115, 0
      %s118 = sadd.s32 %s117, 1
      %s119 = scalar_select %p116, %s117, %s118
      %p122 = pneg %p116
      %p123 = scmp.eq.s32.totalorder %s12, 1
      %p124 = por %p122, %p123
      %p125 = scmp.ne.s32.totalorder %s117, %s120
      %p126 = scmp.eq.s32.totalorder %s12, 0
      %p127 = por %p125, %p126
      %p128 = scmp.ne.s32.totalorder %s117, %s120
      %p129 = scmp.eq.s32.totalorder %s17, 1
      %p130 = por %p128, %p129
      %p131 = scmp.ne.s32.totalorder %s120, %s121
      %p132 = scmp.eq.s32.totalorder %s17, 0
      %p133 = por %p131, %p132
      %p134 = scmp.ne.s32.totalorder %s120, %s121
      %p135 = scmp.eq.s32.totalorder %s18, 1
      %p136 = por %p134, %p135
      %p138 = scmp.ne.s32.totalorder %s121, %s137
      %p139 = scmp.eq.s32.totalorder %s18, 0
      %p140 = por %p138, %p139
      %p141 = scmp.le.s32.totalorder 1, %s12
      %p142 = scmp.lt.s32.totalorder %s12, 3
      %p143 = pnand %p141, %p142
      %p144 = pneg %p143
      // Predicated region
      $region9: #{tpu_custom_call.1} parent=5 // pred_check
        _
      $region10: #{tpu_custom_call.1} parent=5 // pred_check_branch
        %146 = sbr.rel (%p143) target = $region12
      $region11: #{tpu_custom_call.1} parent=5 // pred_region
        %s147 = ssub.s32 %s12, 1
        // Predicated region
        $region13: #{tpu_custom_call.1} parent=11 // pred_check
          %p148 = pneg %p105
        $region14: #{tpu_custom_call.1} parent=11 // pred_check_branch
          %150 = sbr.rel (%p148) target = $region16
        $region15: #{tpu_custom_call.1} parent=11 // pred_region
          _
        $region16: #{tpu_custom_call.1} parent=11 // pred_fallthru
          _
      $region12: #{tpu_custom_call.1} parent=5 // pred_fallthru
        _
      %p151 = scmp.lt.s32.totalorder %s12, 2
      // Predicated region
      $region17: #{tpu_custom_call.1} parent=5 // pred_check
        %p152 = pneg %p151
      $region18: #{tpu_custom_call.1} parent=5 // pred_check_branch
        %154 = sbr.rel (%p152) target = $region20
      $region19: #{tpu_custom_call.1} parent=5 // pred_region
        // Predicated region
        $region21: #{tpu_custom_call.1} parent=19 // pred_check
          %p155 = pneg %p46
        $region22: #{tpu_custom_call.1} parent=19 // pred_check_branch
          %157 = sbr.rel (%p155) target = $region24
        $region23: #{tpu_custom_call.1} parent=19 // pred_region
          %s158 = smul.u32 8, %s20
          %s159 = ssub.s32 9, %s158
          %p160 = scmp.lt.s32.totalorder %s159, 8
          %s161 = scalar_select %p160, %s159, 8
          %s162 = smul.u32 128, %s161
          %s163 = smul.u32 %s162, 2
          %p164 = scmp.lt.s32.totalorder %s19, 1
          %s165 = scalar_select %p164, %s19, 1
          %p166 = scmp.lt.s32.totalorder %s158, 8
          %s167 = scalar_select %p166, %s158, 8
          %s168 = smul.addr %s167, 2
          %s169 = smul.addr %s165, 18
          %s170 = sadd.s32 %s168, %s169
          %s171 = smul.addr %s170, 8
          %s172 = scalar_lea.vmem %s0, %s171
          %s173 = smul.u32 8, %s20
          %s174 = ssub.s32 9, %s173
          %p175 = scmp.lt.s32.totalorder %s174, 8
          %s176 = scalar_select %p175, %s174, 8
          %s177 = smul.u32 128, %s176
          %s178 = smul.u32 %s177, 2
        $region24: #{tpu_custom_call.1} parent=19 // pred_fallthru
          _
        // Predicated region
        $region25: #{tpu_custom_call.1} parent=19 // pred_check
          %p179 = pneg %p78
        $region26: #{tpu_custom_call.1} parent=19 // pred_check_branch
          %181 = sbr.rel (%p179) target = $region28
        $region27: #{tpu_custom_call.1} parent=19 // pred_region
          %s182 = sadd.s32 %s20, 1
          %s183 = smul.u32 %s182, 8
          %p184 = scmp.lt.s32.totalorder %s19, 1
          %s185 = scalar_select %p184, %s19, 1
          %p186 = scmp.lt.s32.totalorder %s183, 8
          %s187 = scalar_select %p186, %s183, 8
          %s188 = smul.addr %s187, 2
          %s189 = smul.addr %s185, 18
          %s190 = sadd.s32 %s188, %s189
          %s191 = smul.addr %s190, 8
          %s192 = scalar_lea.vmem %s1, %s191
          %s193 = sadd.s32 %s20, 1
          %s194 = smul.u32 %s193, 8
        $region28: #{tpu_custom_call.1} parent=19 // pred_fallthru
          _
      $region20: #{tpu_custom_call.1} parent=5 // pred_fallthru
        _
      %p195 = scmp.le.s32.totalorder 1, %s12
      %p196 = scmp.lt.s32.totalorder %s12, 3
      %p197 = pnand %p195, %p196
      %p198 = pneg %p197
      // Predicated region
      $region29: #{tpu_custom_call.1} parent=5 // pred_check
        _
      $region30: #{tpu_custom_call.1} parent=5 // pred_check_branch
        %200 = sbr.rel (%p197) target = $region32
      $region31: #{tpu_custom_call.1} parent=5 // pred_region
        %s201 = ssub.s32 %s12, 1
        %s202 = smul.u32 8, %s22
        %s203 = ssub.s32 9, %s202
        %p204 = scmp.lt.s32.totalorder %s203, 8
        %s205 = scalar_select %p204, %s203, 8
        %s206 = smul.u32 128, %s205
        %s207 = smul.u32 %s206, 2
        %p208 = scmp.lt.s32.totalorder %s21, 1
        %s209 = scalar_select %p208, %s21, 1
        %p210 = scmp.lt.s32.totalorder %s202, 8
        %s211 = scalar_select %p210, %s202, 8
        %s212 = smul.addr %s211, 2
        %s213 = smul.addr %s209, 18
        %s214 = sadd.s32 %s212, %s213
        %s215 = smul.addr %s214, 8
        %s216 = scalar_lea.vmem %s0, %s215
        %p217 = pneg %p52
        %p218 = pneg %p49
        %s219 = sadd.s32 %s22, 1
        %s220 = smul.u32 %s219, 8
        %p221 = scmp.lt.s32.totalorder %s21, 1
        %s222 = scalar_select %p221, %s21, 1
        %p223 = scmp.lt.s32.totalorder %s220, 8
        %s224 = scalar_select %p223, %s220, 8
        %s225 = smul.addr %s224, 2
        %s226 = smul.addr %s222, 18
        %s227 = sadd.s32 %s225, %s226
        %s228 = smul.addr %s227, 8
        %s229 = scalar_lea.vmem %s1, %s228
        %p230 = pneg %p84
        %p231 = pneg %p81
        %p232 = pneg %p105
        %p233 = pneg %p102
        %p234 = pneg %p133
        %p235 = pneg %p130
        %s236 = sand.u32 %s120, 1
        %s237 = scalar_lea.sflag [#allocation3], %s236
        %s238 = sand.u32 %s120, 1
        %s239 = smul.addr %s238, 64
        %s240 = scalar_lea.vmem [#allocation2], %s239
        %s241 = smul.u32 8, %s22
        %s242 = ssub.s32 9, %s241
        %p243 = scmp.lt.s32.totalorder %s242, 8
        %s244 = scalar_select %p243, %s242, 8
        %s245 = smul.u32 128, %s244
        %s246 = smul.u32 %s245, 2
        %p247 = scmp.lt.s32.totalorder %s21, 1
        %s248 = scalar_select %p247, %s21, 1
        %p249 = scmp.lt.s32.totalorder %s241, 8
        %s250 = scalar_select %p249, %s241, 8
        %s251 = smul.addr %s250, 2
        %s252 = smul.addr %s248, 18
        %s253 = sadd.s32 %s251, %s252
        %s254 = smul.addr %s253, 8
        %s255 = scalar_lea.vmem %s0, %s254
        %s256 = smul.u32 8, %s22
        %s257 = ssub.s32 9, %s256
        %p258 = scmp.lt.s32.totalorder %s257, 8
        %s259 = scalar_select %p258, %s257, 8
        %s260 = smul.u32 128, %s259
        %s261 = smul.u32 %s260, 2
        %s262 = sadd.s32 %s22, 1
        %s263 = smul.u32 %s262, 8
        %p264 = scmp.lt.s32.totalorder %s21, 1
        %s265 = scalar_select %p264, %s21, 1
        %p266 = scmp.lt.s32.totalorder %s263, 8
        %s267 = scalar_select %p266, %s263, 8
        %s268 = smul.addr %s267, 2
        %s269 = smul.addr %s265, 18
        %s270 = sadd.s32 %s268, %s269
        %s271 = smul.addr %s270, 8
        %s272 = scalar_lea.vmem %s1, %s271
        %s273 = sadd.s32 %s22, 1
        %s274 = smul.u32 %s273, 8
        %s275 = smul.u32 8, %s22
        %v276 = vld [vmem:[%s255] sm:$0xff]
        %v277 = vld [vmem:[%s255 + $0x10] sm:$0xff]
        %v278 = vld [vmem:[%s255 + $0x20] sm:$0xff]
        %v279 = vld [vmem:[%s255 + $0x30] sm:$0xff]
        %v280 = vld [vmem:[%s255 + $0x40] sm:$0xff]
        %v281 = vld [vmem:[%s255 + $0x50] sm:$0xff]
        %v282 = vld [vmem:[%s255 + $0x60] sm:$0xff]
        %v283 = vld [vmem:[%s255 + $0x70] sm:$0xff]
        %v284 = vld [vmem:[%s2] sm:$0xff]
        %v285 = vld [vmem:[%s2 + $0x8] sm:$0xff]
        %v286 = vld [vmem:[%s255 + $0x1] sm:$0xff]
        %v287 = vld [vmem:[%s255 + $0x11] sm:$0xff]
        %v288 = vld [vmem:[%s255 + $0x21] sm:$0xff]
        %v289 = vld [vmem:[%s255 + $0x31] sm:$0xff]
        %v290 = vld [vmem:[%s255 + $0x41] sm:$0xff]
        %v291 = vld [vmem:[%s255 + $0x51] sm:$0xff]
        %v292 = vld [vmem:[%s255 + $0x61] sm:$0xff]
        %v293 = vld [vmem:[%s255 + $0x71] sm:$0xff]
        %s294 = scalar_lea.vmem %s2, 16
        %v295 = vld [vmem:[%s294] sm:$0xff]
        %v296 = vld [vmem:[%s294 + $0x8] sm:$0xff]
        %vm297 = vcmask 130048
        %v299 = vsel %vm297, %v286, 0
        %v302 = vsel %vm297, %v287, 0
        %v305 = vsel %vm297, %v288, 0
        %v308 = vsel %vm297, %v289, 0
        %v311 = vsel %vm297, %v290, 0
        %v314 = vsel %vm297, %v291, 0
        %v317 = vsel %vm297, %v292, 0
        %v320 = vsel %vm297, %v293, 0
        %322 = vmatprep.subr.mxu0 0.0
        %323 = vmatpush1.msra.mxu0 %v295
        %324 = vmatprep.subr.mxu0 0.0
        %325 = vmatpush1.msra.mxu0 %v296
        %326 = vmatprep.subr.mxu0 0.0
        %327 = vmatpush1.msra.mxu0 0.0
        %328 = vmatprep.subr.mxu0 0.0
        %329 = vmatpush1.msra.mxu0 0.0
        %330 = vmatprep.subr.mxu0 0.0
        %331 = vmatpush1.msra.mxu0 0.0
        %332 = vmatprep.subr.mxu0 0.0
        %333 = vmatpush1.msra.mxu0 0.0
        %334 = vmatprep.subr.mxu0 0.0
        %335 = vmatpush1.msra.mxu0 0.0
        %336 = vmatprep.subr.mxu0 0.0
        %337 = vmatpush1.msra.mxu0 0.0
        %338 = vmatprep.subr.mxu0 0.0
        %339 = vmatpush1.msra.mxu0 0.0
        %340 = vmatprep.subr.mxu0 0.0
        %341 = vmatpush1.msra.mxu0 0.0
        %342 = vmatprep.subr.mxu0 0.0
        %343 = vmatpush1.msra.mxu0 0.0
        %344 = vmatprep.subr.mxu0 0.0
        %345 = vmatpush1.msra.mxu0 0.0
        %346 = vmatprep.subr.mxu0 0.0
        %347 = vmatpush1.msra.mxu0 0.0
        %348 = vmatprep.subr.mxu0 0.0
        %349 = vmatpush1.msra.mxu0 0.0
        %350 = vmatprep.subr.mxu0 0.0
        %351 = vmatpush1.msra.mxu0 0.0
        %352 = vmatprep.subr.mxu0 0.0
        %353 = vmatpush1.msra.mxu0 0.0
        %354 = vmatprep.subr.mxu0 0.0
        %355 = vmatpush1.msra.mxu0 0.0
        %356 = vmatprep.subr.mxu0 0.0
        %357 = vmatpush1.msra.mxu0 0.0
        %358 = vmatprep.subr.mxu0 0.0
        %359 = vmatpush1.msra.mxu0 0.0
        %360 = vmatprep.subr.mxu0 0.0
        %361 = vmatpush1.msra.mxu0 0.0
        %362 = vmatprep.subr.mxu0 0.0
        %363 = vmatpush1.msra.mxu0 0.0
        %364 = vmatprep.subr.mxu0 0.0
        %365 = vmatpush1.msra.mxu0 0.0
        %366 = vmatprep.subr.mxu0 0.0
        %367 = vmatpush1.msra.mxu0 0.0
        %368 = vmatprep.subr.mxu0 0.0
        %369 = vmatpush1.msra.mxu0 0.0
        %370 = vmatprep.subr.mxu0 0.0
        %371 = vmatpush1.msra.mxu0 0.0
        %372 = vmatprep.subr.mxu0 0.0
        %373 = vmatpush1.msra.mxu0 0.0
        %374 = vmatprep.subr.mxu0 0.0
        %375 = vmatpush1.msra.mxu0 0.0
        %376 = vmatprep.subr.mxu0 0.0
        %377 = vmatpush1.msra.mxu0 0.0
        %378 = vmatprep.subr.mxu0 0.0
        %379 = vmatpush1.msra.mxu0 0.0
        %380 = vmatprep.subr.mxu0 0.0
        %381 = vmatpush1.msra.mxu0 0.0
        %382 = vmatprep.subr.mxu0 0.0
        %383 = vmatpush1.msra.mxu0 0.0
        %384 = vmatprep.subr.mxu0 0.0
        %385 = vmatpush1.msra.mxu0 0.0
        %386 = vmatprep.mubr.f32.mxu0 0.0
        %387 = vmatmul.mubr.f32.gmra.mrb[0].mxu0 %v299
        %v388 = vpop.f32.mrb[0].mxu0
        %v389 = vadd.f32 0.0, %v388
        %v390 = vpop.f32.mrb[0].mxu0
        %391 = vmatprep.mubr.f32.mxu0 0.0
        %392 = vmatmul.mubr.f32.gmra.mrb[0].mxu0 %v302
        %v393 = vpop.f32.mrb[0].mxu0
        %v394 = vadd.f32 0.0, %v393
        %v395 = vpop.f32.mrb[0].mxu0
        %396 = vmatprep.mubr.f32.mxu0 0.0
        %397 = vmatmul.mubr.f32.gmra.mrb[0].mxu0 %v305
        %v398 = vpop.f32.mrb[0].mxu0
        %v399 = vadd.f32 0.0, %v398
        %v400 = vpop.f32.mrb[0].mxu0
        %401 = vmatprep.mubr.f32.mxu0 0.0
        %402 = vmatmul.mubr.f32.gmra.mrb[0].mxu0 %v308
        %v403 = vpop.f32.mrb[0].mxu0
        %v404 = vadd.f32 0.0, %v403
        %v405 = vpop.f32.mrb[0].mxu0
        %406 = vmatprep.mubr.f32.mxu0 0.0
        %407 = vmatmul.mubr.f32.gmra.mrb[0].mxu0 %v311
        %v408 = vpop.f32.mrb[0].mxu0
        %v409 = vadd.f32 0.0, %v408
        %v410 = vpop.f32.mrb[0].mxu0
        %411 = vmatprep.mubr.f32.mxu0 0.0
        %412 = vmatmul.mubr.f32.gmra.mrb[0].mxu0 %v314
        %v413 = vpop.f32.mrb[0].mxu0
        %v414 = vadd.f32 0.0, %v413
        %v415 = vpop.f32.mrb[0].mxu0
        %416 = vmatprep.mubr.f32.mxu0 0.0
        %417 = vmatmul.mubr.f32.gmra.mrb[0].mxu0 %v317
        %v418 = vpop.f32.mrb[0].mxu0
        %v419 = vadd.f32 0.0, %v418
        %v420 = vpop.f32.mrb[0].mxu0
        %421 = vmatprep.mubr.f32.mxu0 0.0
        %422 = vmatmul.mubr.f32.gmra.mrb[0].mxu0 %v320
        %v423 = vpop.f32.mrb[0].mxu0
        %v424 = vadd.f32 0.0, %v423
        %v425 = vpop.f32.mrb[0].mxu0
        %426 = vdwg.mxu0
        %v428 = vsel %vm297, %v276, 0
        %v431 = vsel %vm297, %v277, 0
        %v434 = vsel %vm297, %v278, 0
        %v437 = vsel %vm297, %v279, 0
        %v440 = vsel %vm297, %v280, 0
        %v443 = vsel %vm297, %v281, 0
        %v446 = vsel %vm297, %v282, 0
        %v449 = vsel %vm297, %v283, 0
        %451 = vmatprep.subr.mxu0 0.0
        %452 = vmatpush1.msra.mxu0 %v284
        %453 = vmatprep.subr.mxu0 0.0
        %454 = vmatpush1.msra.mxu0 %v285
        %455 = vmatprep.subr.mxu0 0.0
        %456 = vmatpush1.msra.mxu0 0.0
        %457 = vmatprep.subr.mxu0 0.0
        %458 = vmatpush1.msra.mxu0 0.0
        %459 = vmatprep.subr.mxu0 0.0
        %460 = vmatpush1.msra.mxu0 0.0
        %461 = vmatprep.subr.mxu0 0.0
        %462 = vmatpush1.msra.mxu0 0.0
        %463 = vmatprep.subr.mxu0 0.0
        %464 = vmatpush1.msra.mxu0 0.0
        %465 = vmatprep.subr.mxu0 0.0
        %466 = vmatpush1.msra.mxu0 0.0
        %467 = vmatprep.subr.mxu0 0.0
        %468 = vmatpush1.msra.mxu0 0.0
        %469 = vmatprep.subr.mxu0 0.0
        %470 = vmatpush1.msra.mxu0 0.0
        %471 = vmatprep.subr.mxu0 0.0
        %472 = vmatpush1.msra.mxu0 0.0
        %473 = vmatprep.subr.mxu0 0.0
        %474 = vmatpush1.msra.mxu0 0.0
        %475 = vmatprep.subr.mxu0 0.0
        %476 = vmatpush1.msra.mxu0 0.0
        %477 = vmatprep.subr.mxu0 0.0
        %478 = vmatpush1.msra.mxu0 0.0
        %479 = vmatprep.subr.mxu0 0.0
        %480 = vmatpush1.msra.mxu0 0.0
        %481 = vmatprep.subr.mxu0 0.0
        %482 = vmatpush1.msra.mxu0 0.0
        %483 = vmatprep.subr.mxu0 0.0
        %484 = vmatpush1.msra.mxu0 0.0
        %485 = vmatprep.subr.mxu0 0.0
        %486 = vmatpush1.msra.mxu0 0.0
        %487 = vmatprep.subr.mxu0 0.0
        %488 = vmatpush1.msra.mxu0 0.0
        %489 = vmatprep.subr.mxu0 0.0
        %490 = vmatpush1.msra.mxu0 0.0
        %491 = vmatprep.subr.mxu0 0.0
        %492 = vmatpush1.msra.mxu0 0.0
        %493 = vmatprep.subr.mxu0 0.0
        %494 = vmatpush1.msra.mxu0 0.0
        %495 = vmatprep.subr.mxu0 0.0
        %496 = vmatpush1.msra.mxu0 0.0
        %497 = vmatprep.subr.mxu0 0.0
        %498 = vmatpush1.msra.mxu0 0.0
        %499 = vmatprep.subr.mxu0 0.0
        %500 = vmatpush1.msra.mxu0 0.0
        %501 = vmatprep.subr.mxu0 0.0
        %502 = vmatpush1.msra.mxu0 0.0
        %503 = vmatprep.subr.mxu0 0.0
        %504 = vmatpush1.msra.mxu0 0.0
        %505 = vmatprep.subr.mxu0 0.0
        %506 = vmatpush1.msra.mxu0 0.0
        %507 = vmatprep.subr.mxu0 0.0
        %508 = vmatpush1.msra.mxu0 0.0
        %509 = vmatprep.subr.mxu0 0.0
        %510 = vmatpush1.msra.mxu0 0.0
        %511 = vmatprep.subr.mxu0 0.0
        %512 = vmatpush1.msra.mxu0 0.0
        %513 = vmatprep.subr.mxu0 0.0
        %514 = vmatpush1.msra.mxu0 0.0
        %515 = vmatprep.mubr.f32.mxu0 0.0
        %516 = vmatmul.mubr.f32.gmra.mrb[0].mxu0 %v428
        %v517 = vpop.f32.mrb[0].mxu0
        %v518 = vadd.f32 %v389, %v517
        %v519 = vpop.f32.mrb[0].mxu0
        %520 = vmatprep.mubr.f32.mxu0 0.0
        %521 = vmatmul.mubr.f32.gmra.mrb[0].mxu0 %v431
        %v522 = vpop.f32.mrb[0].mxu0
        %v523 = vadd.f32 %v394, %v522
        %v524 = vpop.f32.mrb[0].mxu0
        %525 = vmatprep.mubr.f32.mxu0 0.0
        %526 = vmatmul.mubr.f32.gmra.mrb[0].mxu0 %v434
        %v527 = vpop.f32.mrb[0].mxu0
        %v528 = vadd.f32 %v399, %v527
        %v529 = vpop.f32.mrb[0].mxu0
        %530 = vmatprep.mubr.f32.mxu0 0.0
        %531 = vmatmul.mubr.f32.gmra.mrb[0].mxu0 %v437
        %v532 = vpop.f32.mrb[0].mxu0
        %v533 = vadd.f32 %v404, %v532
        %v534 = vpop.f32.mrb[0].mxu0
        %535 = vmatprep.mubr.f32.mxu0 0.0
        %536 = vmatmul.mubr.f32.gmra.mrb[0].mxu0 %v440
        %v537 = vpop.f32.mrb[0].mxu0
        %v538 = vadd.f32 %v409, %v537
        %v539 = vpop.f32.mrb[0].mxu0
        %540 = vmatprep.mubr.f32.mxu0 0.0
        %541 = vmatmul.mubr.f32.gmra.mrb[0].mxu0 %v443
        %v542 = vpop.f32.mrb[0].mxu0
        %v543 = vadd.f32 %v414, %v542
        %v544 = vpop.f32.mrb[0].mxu0
        %545 = vmatprep.mubr.f32.mxu0 0.0
        %546 = vmatmul.mubr.f32.gmra.mrb[0].mxu0 %v446
        %v547 = vpop.f32.mrb[0].mxu0
        %v548 = vadd.f32 %v419, %v547
        %v549 = vpop.f32.mrb[0].mxu0
        %550 = vmatprep.mubr.f32.mxu0 0.0
        %551 = vmatmul.mubr.f32.gmra.mrb[0].mxu0 %v449
        %v552 = vpop.f32.mrb[0].mxu0
        %v553 = vadd.f32 %v424, %v552
        %v554 = vpop.f32.mrb[0].mxu0
        %555 = vdwg.mxu0
        %v556 = vld [vmem:[%s272] sm:$0xff]
        %s557 = scalar_lea.vmem %s2, 32
        %v558 = vld [vmem:[%s557] sm:$0xff]
        %v559 = vld [vmem:[%s557 + $0x8] sm:$0xff]
        %v560 = vld [vmem:[%s272 + $0x1] sm:$0xff]
        %s561 = scalar_lea.vmem %s2, 48
        %v562 = vld [vmem:[%s561] sm:$0xff]
        %v563 = vld [vmem:[%s561 + $0x8] sm:$0xff]
        %v565 = vsel %vm297, %v560, 0
        %567 = vmatprep.subr.mxu0 0.0
        %568 = vmatpush1.msra.mxu0 %v562
        %569 = vmatprep.subr.mxu0 0.0
        %570 = vmatpush1.msra.mxu0 %v563
        %571 = vmatprep.subr.mxu0 0.0
        %572 = vmatpush1.msra.mxu0 0.0
        %573 = vmatprep.subr.mxu0 0.0
        %574 = vmatpush1.msra.mxu0 0.0
        %575 = vmatprep.subr.mxu0 0.0
        %576 = vmatpush1.msra.mxu0 0.0
        %577 = vmatprep.subr.mxu0 0.0
        %578 = vmatpush1.msra.mxu0 0.0
        %579 = vmatprep.subr.mxu0 0.0
        %580 = vmatpush1.msra.mxu0 0.0
        %581 = vmatprep.subr.mxu0 0.0
        %582 = vmatpush1.msra.mxu0 0.0
        %583 = vmatprep.subr.mxu0 0.0
        %584 = vmatpush1.msra.mxu0 0.0
        %585 = vmatprep.subr.mxu0 0.0
        %586 = vmatpush1.msra.mxu0 0.0
        %587 = vmatprep.subr.mxu0 0.0
        %588 = vmatpush1.msra.mxu0 0.0
        %589 = vmatprep.subr.mxu0 0.0
        %590 = vmatpush1.msra.mxu0 0.0
        %591 = vmatprep.subr.mxu0 0.0
        %592 = vmatpush1.msra.mxu0 0.0
        %593 = vmatprep.subr.mxu0 0.0
        %594 = vmatpush1.msra.mxu0 0.0
        %595 = vmatprep.subr.mxu0 0.0
        %596 = vmatpush1.msra.mxu0 0.0
        %597 = vmatprep.subr.mxu0 0.0
        %598 = vmatpush1.msra.mxu0 0.0
        %599 = vmatprep.subr.mxu0 0.0
        %600 = vmatpush1.msra.mxu0 0.0
        %601 = vmatprep.subr.mxu0 0.0
        %602 = vmatpush1.msra.mxu0 0.0
        %603 = vmatprep.subr.mxu0 0.0
        %604 = vmatpush1.msra.mxu0 0.0
        %605 = vmatprep.subr.mxu0 0.0
        %606 = vmatpush1.msra.mxu0 0.0
        %607 = vmatprep.subr.mxu0 0.0
        %608 = vmatpush1.msra.mxu0 0.0
        %609 = vmatprep.subr.mxu0 0.0
        %610 = vmatpush1.msra.mxu0 0.0
        %611 = vmatprep.subr.mxu0 0.0
        %612 = vmatpush1.msra.mxu0 0.0
        %613 = vmatprep.subr.mxu0 0.0
        %614 = vmatpush1.msra.mxu0 0.0
        %615 = vmatprep.subr.mxu0 0.0
        %616 = vmatpush1.msra.mxu0 0.0
        %617 = vmatprep.subr.mxu0 0.0
        %618 = vmatpush1.msra.mxu0 0.0
        %619 = vmatprep.subr.mxu0 0.0
        %620 = vmatpush1.msra.mxu0 0.0
        %621 = vmatprep.subr.mxu0 0.0
        %622 = vmatpush1.msra.mxu0 0.0
        %623 = vmatprep.subr.mxu0 0.0
        %624 = vmatpush1.msra.mxu0 0.0
        %625 = vmatprep.subr.mxu0 0.0
        %626 = vmatpush1.msra.mxu0 0.0
        %627 = vmatprep.subr.mxu0 0.0
        %628 = vmatpush1.msra.mxu0 0.0
        %629 = vmatprep.subr.mxu0 0.0
        %630 = vmatpush1.msra.mxu0 0.0
        %631 = vmatprep.mubr.f32.mxu0 0.0
        %632 = vmatmul.mubr.f32.gmra.mrb[0].mxu0 %v565
        %v633 = vpop.f32.mrb[0].mxu0
        %v634 = vadd.f32 0.0, %v633
        %v635 = vpop.f32.mrb[0].mxu0
        %636 = vdwg.mxu0
        %v638 = vsel %vm297, %v556, 0
        %640 = vmatprep.subr.mxu0 0.0
        %641 = vmatpush1.msra.mxu0 %v558
        %642 = vmatprep.subr.mxu0 0.0
        %643 = vmatpush1.msra.mxu0 %v559
        %644 = vmatprep.subr.mxu0 0.0
        %645 = vmatpush1.msra.mxu0 0.0
        %646 = vmatprep.subr.mxu0 0.0
        %647 = vmatpush1.msra.mxu0 0.0
        %648 = vmatprep.subr.mxu0 0.0
        %649 = vmatpush1.msra.mxu0 0.0
        %650 = vmatprep.subr.mxu0 0.0
        %651 = vmatpush1.msra.mxu0 0.0
        %652 = vmatprep.subr.mxu0 0.0
        %653 = vmatpush1.msra.mxu0 0.0
        %654 = vmatprep.subr.mxu0 0.0
        %655 = vmatpush1.msra.mxu0 0.0
        %656 = vmatprep.subr.mxu0 0.0
        %657 = vmatpush1.msra.mxu0 0.0
        %658 = vmatprep.subr.mxu0 0.0
        %659 = vmatpush1.msra.mxu0 0.0
        %660 = vmatprep.subr.mxu0 0.0
        %661 = vmatpush1.msra.mxu0 0.0
        %662 = vmatprep.subr.mxu0 0.0
        %663 = vmatpush1.msra.mxu0 0.0
        %664 = vmatprep.subr.mxu0 0.0
        %665 = vmatpush1.msra.mxu0 0.0
        %666 = vmatprep.subr.mxu0 0.0
        %667 = vmatpush1.msra.mxu0 0.0
        %668 = vmatprep.subr.mxu0 0.0
        %669 = vmatpush1.msra.mxu0 0.0
        %670 = vmatprep.subr.mxu0 0.0
        %671 = vmatpush1.msra.mxu0 0.0
        %672 = vmatprep.subr.mxu0 0.0
        %673 = vmatpush1.msra.mxu0 0.0
        %674 = vmatprep.subr.mxu0 0.0
        %675 = vmatpush1.msra.mxu0 0.0
        %676 = vmatprep.subr.mxu0 0.0
        %677 = vmatpush1.msra.mxu0 0.0
        %678 = vmatprep.subr.mxu0 0.0
        %679 = vmatpush1.msra.mxu0 0.0
        %680 = vmatprep.subr.mxu0 0.0
        %681 = vmatpush1.msra.mxu0 0.0
        %682 = vmatprep.subr.mxu0 0.0
        %683 = vmatpush1.msra.mxu0 0.0
        %684 = vmatprep.subr.mxu0 0.0
        %685 = vmatpush1.msra.mxu0 0.0
        %686 = vmatprep.subr.mxu0 0.0
        %687 = vmatpush1.msra.mxu0 0.0
        %688 = vmatprep.subr.mxu0 0.0
        %689 = vmatpush1.msra.mxu0 0.0
        %690 = vmatprep.subr.mxu0 0.0
        %691 = vmatpush1.msra.mxu0 0.0
        %692 = vmatprep.subr.mxu0 0.0
        %693 = vmatpush1.msra.mxu0 0.0
        %694 = vmatprep.subr.mxu0 0.0
        %695 = vmatpush1.msra.mxu0 0.0
        %696 = vmatprep.subr.mxu0 0.0
        %697 = vmatpush1.msra.mxu0 0.0
        %698 = vmatprep.subr.mxu0 0.0
        %699 = vmatpush1.msra.mxu0 0.0
        %700 = vmatprep.subr.mxu0 0.0
        %701 = vmatpush1.msra.mxu0 0.0
        %702 = vmatprep.subr.mxu0 0.0
        %703 = vmatpush1.msra.mxu0 0.0
        %704 = vmatprep.mubr.f32.mxu0 0.0
        %705 = vmatmul.mubr.f32.gmra.mrb[0].mxu0 %v638
        %v706 = vpop.f32.mrb[0].mxu0
        %v707 = vadd.f32 %v634, %v706
        %v708 = vpop.f32.mrb[0].mxu0
        %709 = vdwg.mxu0
        %s710 = scalar_lea.vmem %s255, 16
        %v711 = vld [vmem:[%s710] sm:$0xff]
        %v712 = vld [vmem:[%s710 + $0x10] sm:$0xff]
        %v713 = vld [vmem:[%s710 + $0x20] sm:$0xff]
        %v714 = vld [vmem:[%s710 + $0x30] sm:$0xff]
        %v715 = vld [vmem:[%s710 + $0x40] sm:$0xff]
        %v716 = vld [vmem:[%s710 + $0x50] sm:$0xff]
        %v717 = vld [vmem:[%s710 + $0x60] sm:$0xff]
        %v718 = vld [vmem:[%s710 + $0x1] sm:$0xff]
        %v719 = vld [vmem:[%s710 + $0x11] sm:$0xff]
        %v720 = vld [vmem:[%s710 + $0x21] sm:$0xff]
        %v721 = vld [vmem:[%s710 + $0x31] sm:$0xff]
        %v722 = vld [vmem:[%s710 + $0x41] sm:$0xff]
        %v723 = vld [vmem:[%s710 + $0x51] sm:$0xff]
        %v724 = vld [vmem:[%s710 + $0x61] sm:$0xff]
        %v726 = vsel %vm297, %v718, 0
        %v729 = vsel %vm297, %v719, 0
        %v732 = vsel %vm297, %v720, 0
        %v735 = vsel %vm297, %v721, 0
        %v738 = vsel %vm297, %v722, 0
        %v741 = vsel %vm297, %v723, 0
        %v744 = vsel %vm297, %v724, 0
        %746 = vmatprep.subr.mxu0 0.0
        %747 = vmatpush1.msra.mxu0 %v562
        %748 = vmatprep.subr.mxu0 0.0
        %749 = vmatpush1.msra.mxu0 %v563
        %750 = vmatprep.subr.mxu0 0.0
        %751 = vmatpush1.msra.mxu0 0.0
        %752 = vmatprep.subr.mxu0 0.0
        %753 = vmatpush1.msra.mxu0 0.0
        %754 = vmatprep.subr.mxu0 0.0
        %755 = vmatpush1.msra.mxu0 0.0
        %756 = vmatprep.subr.mxu0 0.0
        %757 = vmatpush1.msra.mxu0 0.0
        %758 = vmatprep.subr.mxu0 0.0
        %759 = vmatpush1.msra.mxu0 0.0
        %760 = vmatprep.subr.mxu0 0.0
        %761 = vmatpush1.msra.mxu0 0.0
        %762 = vmatprep.subr.mxu0 0.0
        %763 = vmatpush1.msra.mxu0 0.0
        %764 = vmatprep.subr.mxu0 0.0
        %765 = vmatpush1.msra.mxu0 0.0
        %766 = vmatprep.subr.mxu0 0.0
        %767 = vmatpush1.msra.mxu0 0.0
        %768 = vmatprep.subr.mxu0 0.0
        %769 = vmatpush1.msra.mxu0 0.0
        %770 = vmatprep.subr.mxu0 0.0
        %771 = vmatpush1.msra.mxu0 0.0
        %772 = vmatprep.subr.mxu0 0.0
        %773 = vmatpush1.msra.mxu0 0.0
        %774 = vmatprep.subr.mxu0 0.0
        %775 = vmatpush1.msra.mxu0 0.0
        %776 = vmatprep.subr.mxu0 0.0
        %777 = vmatpush1.msra.mxu0 0.0
        %778 = vmatprep.subr.mxu0 0.0
        %779 = vmatpush1.msra.mxu0 0.0
        %780 = vmatprep.subr.mxu0 0.0
        %781 = vmatpush1.msra.mxu0 0.0
        %782 = vmatprep.subr.mxu0 0.0
        %783 = vmatpush1.msra.mxu0 0.0
        %784 = vmatprep.subr.mxu0 0.0
        %785 = vmatpush1.msra.mxu0 0.0
        %786 = vmatprep.subr.mxu0 0.0
        %787 = vmatpush1.msra.mxu0 0.0
        %788 = vmatprep.subr.mxu0 0.0
        %789 = vmatpush1.msra.mxu0 0.0
        %790 = vmatprep.subr.mxu0 0.0
        %791 = vmatpush1.msra.mxu0 0.0
        %792 = vmatprep.subr.mxu0 0.0
        %793 = vmatpush1.msra.mxu0 0.0
        %794 = vmatprep.subr.mxu0 0.0
        %795 = vmatpush1.msra.mxu0 0.0
        %796 = vmatprep.subr.mxu0 0.0
        %797 = vmatpush1.msra.mxu0 0.0
        %798 = vmatprep.subr.mxu0 0.0
        %799 = vmatpush1.msra.mxu0 0.0
        %800 = vmatprep.subr.mxu0 0.0
        %801 = vmatpush1.msra.mxu0 0.0
        %802 = vmatprep.subr.mxu0 0.0
        %803 = vmatpush1.msra.mxu0 0.0
        %804 = vmatprep.subr.mxu0 0.0
        %805 = vmatpush1.msra.mxu0 0.0
        %806 = vmatprep.subr.mxu0 0.0
        %807 = vmatpush1.msra.mxu0 0.0
        %808 = vmatprep.subr.mxu0 0.0
        %809 = vmatpush1.msra.mxu0 0.0
        %810 = vmatprep.mubr.f32.mxu0 0.0
        %811 = vmatmul.mubr.f32.gmra.mrb[0].mxu0 %v726
        %v812 = vpop.f32.mrb[0].mxu0
        %v813 = vadd.f32 0.0, %v812
        %v814 = vpop.f32.mrb[0].mxu0
        %815 = vmatprep.mubr.f32.mxu0 0.0
        %816 = vmatmul.mubr.f32.gmra.mrb[0].mxu0 %v729
        %v817 = vpop.f32.mrb[0].mxu0
        %v818 = vadd.f32 0.0, %v817
        %v819 = vpop.f32.mrb[0].mxu0
        %820 = vmatprep.mubr.f32.mxu0 0.0
        %821 = vmatmul.mubr.f32.gmra.mrb[0].mxu0 %v732
        %v822 = vpop.f32.mrb[0].mxu0
        %v823 = vadd.f32 0.0, %v822
        %v824 = vpop.f32.mrb[0].mxu0
        %825 = vmatprep.mubr.f32.mxu0 0.0
        %826 = vmatmul.mubr.f32.gmra.mrb[0].mxu0 %v735
        %v827 = vpop.f32.mrb[0].mxu0
        %v828 = vadd.f32 0.0, %v827
        %v829 = vpop.f32.mrb[0].mxu0
        %830 = vmatprep.mubr.f32.mxu0 0.0
        %831 = vmatmul.mubr.f32.gmra.mrb[0].mxu0 %v738
        %v832 = vpop.f32.mrb[0].mxu0
        %v833 = vadd.f32 0.0, %v832
        %v834 = vpop.f32.mrb[0].mxu0
        %835 = vmatprep.mubr.f32.mxu0 0.0
        %836 = vmatmul.mubr.f32.gmra.mrb[0].mxu0 %v741
        %v837 = vpop.f32.mrb[0].mxu0
        %v838 = vadd.f32 0.0, %v837
        %v839 = vpop.f32.mrb[0].mxu0
        %840 = vmatprep.mubr.f32.mxu0 0.0
        %841 = vmatmul.mubr.f32.gmra.mrb[0].mxu0 %v744
        %v842 = vpop.f32.mrb[0].mxu0
        %v843 = vadd.f32 0.0, %v842
        %v844 = vpop.f32.mrb[0].mxu0
        %845 = vdwg.mxu0
        %v847 = vsel %vm297, %v711, 0
        %v850 = vsel %vm297, %v712, 0
        %v853 = vsel %vm297, %v713, 0
        %v856 = vsel %vm297, %v714, 0
        %v859 = vsel %vm297, %v715, 0
        %v862 = vsel %vm297, %v716, 0
        %v865 = vsel %vm297, %v717, 0
        %867 = vmatprep.subr.mxu0 0.0
        %868 = vmatpush1.msra.mxu0 %v558
        %869 = vmatprep.subr.mxu0 0.0
        %870 = vmatpush1.msra.mxu0 %v559
        %871 = vmatprep.subr.mxu0 0.0
        %872 = vmatpush1.msra.mxu0 0.0
        %873 = vmatprep.subr.mxu0 0.0
        %874 = vmatpush1.msra.mxu0 0.0
        %875 = vmatprep.subr.mxu0 0.0
        %876 = vmatpush1.msra.mxu0 0.0
        %877 = vmatprep.subr.mxu0 0.0
        %878 = vmatpush1.msra.mxu0 0.0
        %879 = vmatprep.subr.mxu0 0.0
        %880 = vmatpush1.msra.mxu0 0.0
        %881 = vmatprep.subr.mxu0 0.0
        %882 = vmatpush1.msra.mxu0 0.0
        %883 = vmatprep.subr.mxu0 0.0
        %884 = vmatpush1.msra.mxu0 0.0
        %885 = vmatprep.subr.mxu0 0.0
        %886 = vmatpush1.msra.mxu0 0.0
        %887 = vmatprep.subr.mxu0 0.0
        %888 = vmatpush1.msra.mxu0 0.0
        %889 = vmatprep.subr.mxu0 0.0
        %890 = vmatpush1.msra.mxu0 0.0
        %891 = vmatprep.subr.mxu0 0.0
        %892 = vmatpush1.msra.mxu0 0.0
        %893 = vmatprep.subr.mxu0 0.0
        %894 = vmatpush1.msra.mxu0 0.0
        %895 = vmatprep.subr.mxu0 0.0
        %896 = vmatpush1.msra.mxu0 0.0
        %897 = vmatprep.subr.mxu0 0.0
        %898 = vmatpush1.msra.mxu0 0.0
        %899 = vmatprep.subr.mxu0 0.0
        %900 = vmatpush1.msra.mxu0 0.0
        %901 = vmatprep.subr.mxu0 0.0
        %902 = vmatpush1.msra.mxu0 0.0
        %903 = vmatprep.subr.mxu0 0.0
        %904 = vmatpush1.msra.mxu0 0.0
        %905 = vmatprep.subr.mxu0 0.0
        %906 = vmatpush1.msra.mxu0 0.0
        %907 = vmatprep.subr.mxu0 0.0
        %908 = vmatpush1.msra.mxu0 0.0
        %909 = vmatprep.subr.mxu0 0.0
        %910 = vmatpush1.msra.mxu0 0.0
        %911 = vmatprep.subr.mxu0 0.0
        %912 = vmatpush1.msra.mxu0 0.0
        %913 = vmatprep.subr.mxu0 0.0
        %914 = vmatpush1.msra.mxu0 0.0
        %915 = vmatprep.subr.mxu0 0.0
        %916 = vmatpush1.msra.mxu0 0.0
        %917 = vmatprep.subr.mxu0 0.0
        %918 = vmatpush1.msra.mxu0 0.0
        %919 = vmatprep.subr.mxu0 0.0
        %920 = vmatpush1.msra.mxu0 0.0
        %921 = vmatprep.subr.mxu0 0.0
        %922 = vmatpush1.msra.mxu0 0.0
        %923 = vmatprep.subr.mxu0 0.0
        %924 = vmatpush1.msra.mxu0 0.0
        %925 = vmatprep.subr.mxu0 0.0
        %926 = vmatpush1.msra.mxu0 0.0
        %927 = vmatprep.subr.mxu0 0.0
        %928 = vmatpush1.msra.mxu0 0.0
        %929 = vmatprep.subr.mxu0 0.0
        %930 = vmatpush1.msra.mxu0 0.0
        %931 = vmatprep.mubr.f32.mxu0 0.0
        %932 = vmatmul.mubr.f32.gmra.mrb[0].mxu0 %v847
        %v933 = vpop.f32.mrb[0].mxu0
        %v934 = vadd.f32 %v813, %v933
        %v935 = vpop.f32.mrb[0].mxu0
        %936 = vmatprep.mubr.f32.mxu0 0.0
        %937 = vmatmul.mubr.f32.gmra.mrb[0].mxu0 %v850
        %v938 = vpop.f32.mrb[0].mxu0
        %v939 = vadd.f32 %v818, %v938
        %v940 = vpop.f32.mrb[0].mxu0
        %941 = vmatprep.mubr.f32.mxu0 0.0
        %942 = vmatmul.mubr.f32.gmra.mrb[0].mxu0 %v853
        %v943 = vpop.f32.mrb[0].mxu0
        %v944 = vadd.f32 %v823, %v943
        %v945 = vpop.f32.mrb[0].mxu0
        %946 = vmatprep.mubr.f32.mxu0 0.0
        %947 = vmatmul.mubr.f32.gmra.mrb[0].mxu0 %v856
        %v948 = vpop.f32.mrb[0].mxu0
        %v949 = vadd.f32 %v828, %v948
        %v950 = vpop.f32.mrb[0].mxu0
        %951 = vmatprep.mubr.f32.mxu0 0.0
        %952 = vmatmul.mubr.f32.gmra.mrb[0].mxu0 %v859
        %v953 = vpop.f32.mrb[0].mxu0
        %v954 = vadd.f32 %v833, %v953
        %v955 = vpop.f32.mrb[0].mxu0
        %956 = vmatprep.mubr.f32.mxu0 0.0
        %957 = vmatmul.mubr.f32.gmra.mrb[0].mxu0 %v862
        %v958 = vpop.f32.mrb[0].mxu0
        %v959 = vadd.f32 %v838, %v958
        %v960 = vpop.f32.mrb[0].mxu0
        %961 = vmatprep.mubr.f32.mxu0 0.0
        %962 = vmatmul.mubr.f32.gmra.mrb[0].mxu0 %v865
        %v963 = vpop.f32.mrb[0].mxu0
        %v964 = vadd.f32 %v843, %v963
        %v965 = vpop.f32.mrb[0].mxu0
        %966 = vdwg.mxu0
        %v967 = vadd.f32 %v518, %v934
        %v968 = vadd.f32 %v523, %v939
        %v969 = vadd.f32 %v528, %v944
        %v970 = vadd.f32 %v533, %v949
        %v971 = vadd.f32 %v538, %v954
        %v972 = vadd.f32 %v543, %v959
        %v973 = vadd.f32 %v548, %v964
        %vm974 = vcmask 64512
        %975 = vst.msk [vmem:[%s240] sm:$0xff] %vm974, %v967
        %976 = vst.msk [vmem:[%s240 + $0x8] sm:$0xff] %vm974, %v968
        %977 = vst.msk [vmem:[%s240 + $0x10] sm:$0xff] %vm974, %v969
        %978 = vst.msk [vmem:[%s240 + $0x18] sm:$0xff] %vm974, %v970
        %979 = vst.msk [vmem:[%s240 + $0x20] sm:$0xff] %vm974, %v971
        %980 = vst.msk [vmem:[%s240 + $0x28] sm:$0xff] %vm974, %v972
        %981 = vst.msk [vmem:[%s240 + $0x30] sm:$0xff] %vm974, %v973
        %v982 = vadd.f32 %v553, %v707
        %s983 = scalar_lea.vmem %s240, 56 [#allocation2]
        %984 = vst.msk [vmem:[%s983] sm:$0xff] %vm974, %v982
        %s985 = sand.u32 %s120, 1
        %s986 = scalar_lea.sflag [#allocation3], %s985
        %s987 = sand.u32 %s120, 1
        %s988 = smul.addr %s987, 64
        %s989 = scalar_lea.vmem [#allocation2], %s988
        // Predicated region
        $region33: #{tpu_custom_call.1} parent=31 // pred_check
          %p990 = pneg %p130
        $region34: #{tpu_custom_call.1} parent=31 // pred_check_branch
          %992 = sbr.rel (%p990) target = $region36
        $region35: #{tpu_custom_call.1} parent=31 // pred_region
          %s993 = smul.u32 8, %s22
          %s995 = ssub.s32 1024, 1024
          %996 = vsyncadd %s986, %s995
          %s997 = smul.addr %s21, 8
          %s998 = sadd.s32 %s993, %s997
          %s999 = smul.addr %s998, 128
          %s1000 = scalar_lea.hbm %s3, %s999
          %s1001 = sshll.u32 %s989, 4
          %s1002 = int_to_ptr.vmem [resolvable:$true] %s1001
          %1007 = dma.vmem_to_hbm [thread:$0]  %s1002, 1024, %s1000, %s986, 128, 128, 8
        $region36: #{tpu_custom_call.1} parent=31 // pred_fallthru
          _
      $region32: #{tpu_custom_call.1} parent=5 // pred_fallthru
        _
      %p1008 = scmp.le.s32.totalorder 2, %s12
      // Predicated region
      $region37: #{tpu_custom_call.1} parent=5 // pred_check
        %p1009 = pneg %p1008
      $region38: #{tpu_custom_call.1} parent=5 // pred_check_branch
        %1011 = sbr.rel (%p1009) target = $region40
      $region39: #{tpu_custom_call.1} parent=5 // pred_region
        %s1012 = ssub.s32 %s12, 2
        // Predicated region
        $region41: #{tpu_custom_call.1} parent=39 // pred_check
          %p1013 = pneg %p136
        $region42: #{tpu_custom_call.1} parent=39 // pred_check_branch
          %1015 = sbr.rel (%p1013) target = $region44
        $region43: #{tpu_custom_call.1} parent=39 // pred_region
          %s1016 = sand.u32 %s121, 1
          %s1017 = scalar_lea.sflag [#allocation3], %s1016
          %s1018 = sand.u32 %s121, 1
          %s1019 = smul.addr %s1018, 64
          %s1020 = scalar_lea.vmem [#allocation2], %s1019
          %1021 = dma.done %s1017, 1024
        $region44: #{tpu_custom_call.1} parent=39 // pred_fallthru
          _
      $region40: #{tpu_custom_call.1} parent=5 // pred_fallthru
        _
    $region6: #{tpu_custom_call.1} parent=1 // loop_footer
      %s16 = sadd.s32 1, %s12
    $region7: #{tpu_custom_call.1} parent=1 // loop_footer_branch
      %11 = sbr.rel target = $region3
    $region8: #{tpu_custom_call.1} parent=1 // loop_exit
      _
    %1022 = vsyncpa [#allocation3], 1
    %s1023 = scalar_lea.sflag [#allocation3], 1
    %1024 = vsyncpa %s1023, 1

</llo_original>
